<compile_context>
chip_gen: v6e
topology: v6e:2x2x1
jax: 0.10.0
libtpu: 0.0.40
codegen_flags: <defaults>
</compile_context>

<pallas_src>
import jax
import jax.numpy as jnp
from jax.experimental import pallas as pl
from jax.experimental.pallas import tpu as pltpu


# ---------------------------------------------------------------------------
# Fused LSTM stack: one pallas_call, layers unrolled at trace time, time loop
# as lax.fori_loop, h/c carried in registers, inter-layer acts in VMEM scratch.
# ---------------------------------------------------------------------------
def _make_lstm_stack_kernel(num_layers, seq_len, batch, hidden):
    """Kernel args: x_ref, (w_ref, b_ref) * num_layers, out_ref, act_a, act_b."""

    def kernel(*refs):
        x_ref = refs[0]
        w_refs = refs[1:1 + 2 * num_layers]
        out_ref = refs[1 + 2 * num_layers]
        act_refs = refs[2 + 2 * num_layers:]          # two ping-pong VMEM buffers

        for layer in range(num_layers):
            src = x_ref if layer == 0 else act_refs[(layer - 1) % 2]
            dst = out_ref if layer == num_layers - 1 else act_refs[layer % 2]

            # Weights are loop-invariant: load once per layer (kept in VMEM/vregs).
            w = w_refs[2 * layer][...]        # (Din + H, 4H), gate order [i|f|g|o]
            b = w_refs[2 * layer + 1][...]    # (1, 4H) == b_ih + b_hh

            def step(t, carry, src=src, dst=dst, w=w, b=b):
                h, c = carry
                xt = src[t]                                   # (B, Din)
                xh = jnp.concatenate([xt, h], axis=-1)        # (B, Din + H)
                # single fused MXU matmul per step (input + recurrent)
                gates = jnp.dot(xh, w, preferred_element_type=jnp.float32) + b
                i_g = jax.nn.sigmoid(gates[:, 0 * hidden:1 * hidden])
                f_g = jax.nn.sigmoid(gates[:, 1 * hidden:2 * hidden])
                g_g = jnp.tanh(gates[:, 2 * hidden:3 * hidden])
                o_g = jax.nn.sigmoid(gates[:, 3 * hidden:4 * hidden])
                c_new = f_g * c + i_g * g_g
                h_new = o_g * jnp.tanh(c_new)
                dst[t] = h_new.astype(dst.dtype)
                return (h_new, c_new)

            zeros = jnp.zeros((batch, hidden), jnp.float32)
            jax.lax.fori_loop(0, seq_len, step, (zeros, zeros))

    return kernel


def _full_spec(shape):
    ndim = len(shape)

    def idx(i):
        return (0,) * ndim

    return pl.BlockSpec(shape, idx)


def lstm_stack(x_seq, lstm_params):
    """x_seq: (T1, B, E) f32 -> (T1, B, H) f32.

    lstm_params: list of (w_packed (Din+H, 4H), bias (1, 4H)).
    """
    T1, B, _ = x_seq.shape
    num_layers = len(lstm_params)
    H = lstm_params[0][0].shape[1] // 4

    flat = []
    for (w, b) in lstm_params:
        flat += [w, b]

    flops = 0
    bytes_acc = int(x_seq.size) * 4 + T1 * B * H * 4
    for (w, b) in lstm_params:
        flops += 2 * T1 * B * int(w.shape[0]) * int(w.shape[1])
        bytes_acc += (int(w.size) + int(b.size)) * 4
    transcendentals = num_layers * T1 * B * 5 * H   # 3 sigmoid + 2 tanh per unit

    kernel = _make_lstm_stack_kernel(num_layers, T1, B, H)
    return pl.pallas_call(
        kernel,
        out_shape=jax.ShapeDtypeStruct((T1, B, H), jnp.float32),
        grid=(1,),
        in_specs=[_full_spec(tuple(x_seq.shape))] + [_full_spec(tuple(a.shape)) for a in flat],
        out_specs=_full_spec((T1, B, H)),
        scratch_shapes=[
            pltpu.VMEM((T1, B, H), jnp.float32),
            pltpu.VMEM((T1, B, H), jnp.float32),
        ],
        compiler_params=pltpu.CompilerParams(
            dimension_semantics=("arbitrary",),
            vmem_limit_bytes=48 * 1024 * 1024,
        ),
        cost_estimate=pl.CostEstimate(
            flops=int(flops),
            transcendentals=int(transcendentals),
            bytes_accessed=int(bytes_acc),
        ),
    )(x_seq, *flat)


# ---------------------------------------------------------------------------
# Linear head: tiled (rows x V) matmul, weights pre-transposed to (H, V).
# ---------------------------------------------------------------------------
def _linear_kernel(h_ref, w_ref, b_ref, o_ref):
    o_ref[...] = (
        jnp.dot(h_ref[...], w_ref[...], preferred_element_type=jnp.float32)
        + b_ref[...]
    ).astype(o_ref.dtype)


def linear(h_flat, w_t, b):
    """h_flat: (N, H), w_t: (H, V), b: (1, V) -> (N, V)."""
    N, H = h_flat.shape
    V = w_t.shape[1]
    # Row tile: multiple of 8 (or full); vocab tile: multiple of 128 (or full).
    tn = N if N <= 256 else 256
    tv = V if V <= 1024 else 1024
    grid = (pl.cdiv(N, tn), pl.cdiv(V, tv))
    return pl.pallas_call(
        _linear_kernel,
        out_shape=jax.ShapeDtypeStruct((N, V), jnp.float32),
        grid=grid,
        in_specs=[
            pl.BlockSpec((tn, H), lambda i, j: (i, 0)),
            pl.BlockSpec((H, tv), lambda i, j: (0, j)),
            pl.BlockSpec((1, tv), lambda i, j: (0, j)),
        ],
        out_specs=pl.BlockSpec((tn, tv), lambda i, j: (i, j)),
        compiler_params=pltpu.CompilerParams(
            dimension_semantics=("parallel", "parallel"),
            vmem_limit_bytes=48 * 1024 * 1024,
        ),
        cost_estimate=pl.CostEstimate(
            flops=2 * N * H * V,
            transcendentals=0,
            bytes_accessed=4 * (N * H + H * V + V + N * V),
        ),
    )(h_flat, w_t, b)


# ---------------------------------------------------------------------------
# Parameters (stored directly in packed / pre-transposed kernel layout).
# ---------------------------------------------------------------------------
def init_params(key, embed_size, hidden_size, vocab_size, num_layers):
    keys = jax.random.split(key, 1 + 2 * num_layers + 2)
    params = {
        "embed": jax.random.normal(keys[0], (vocab_size, embed_size), jnp.float32),
        "lstm": [],
    }
    k = 1.0 / float(hidden_size) ** 0.5
    idx = 1
    for layer in range(num_layers):
        din = embed_size if layer == 0 else hidden_size
        # packed [W_ih^T ; W_hh^T] : (din + H, 4H), PyTorch gate order (i, f, g, o)
        w = jax.random.uniform(keys[idx], (din + hidden_size, 4 * hidden_size),
                               jnp.float32, -k, k)
        # combined bias (b_ih + b_hh)
        b = jax.random.uniform(keys[idx + 1], (1, 4 * hidden_size),
                               jnp.float32, -2 * k, 2 * k)
        params["lstm"].append((w, b))
        idx += 2
    params["lin_w_t"] = jax.random.uniform(keys[idx], (hidden_size, vocab_size),
                                           jnp.float32, -k, k)
    params["lin_b"] = jax.random.uniform(keys[idx + 1], (1, vocab_size),
                                         jnp.float32, -k, k)
    return params


# ---------------------------------------------------------------------------
# DecoderRNN.forward
# ---------------------------------------------------------------------------
@jax.jit
def decoder_forward(params, features, captions):
    # embed(captions): (T, B) -> (T, B, E); dropout is identity (eval mode).
    emb = jnp.take(params["embed"], captions, axis=0)
    # cat(features.unsqueeze(0), embeddings) along time -> (T+1, B, E)
    x = jnp.concatenate([features[None, :, :], emb], axis=0)
    h_seq = lstm_stack(x, params["lstm"])                      # (T+1, B, H)
    T1, B, H = h_seq.shape
    logits = linear(h_seq.reshape(T1 * B, H), params["lin_w_t"], params["lin_b"])
    return logits.reshape(T1, B, -1)                           # (T+1, B, V)


# Pure-JAX reference for a sanity check.
def decoder_forward_ref(params, features, captions):
    emb = jnp.take(params["embed"], captions, axis=0)
    x = jnp.concatenate([features[None, :, :], emb], axis=0)
    for (w, b) in params["lstm"]:
        H = w.shape[1] // 4
        B = x.shape[1]

        def step(carry, xt, w=w, b=b, H=H):
            h, c = carry
            gates = jnp.concatenate([xt, h], axis=-1) @ w + b
            i = jax.nn.sigmoid(gates[:, 0 * H:1 * H])
            f = jax.nn.sigmoid(gates[:, 1 * H:2 * H])
            g = jnp.tanh(gates[:, 2 * H:3 * H])
            o = jax.nn.sigmoid(gates[:, 3 * H:4 * H])
            c = f * c + i * g
            h = o * jnp.tanh(c)
            return (h, c), h

        init = (jnp.zeros((B, H), jnp.float32), jnp.zeros((B, H), jnp.float32))
        _, x = jax.lax.scan(step, init, x)
    return x @ params["lin_w_t"] + params["lin_b"]


if __name__ == "__main__":
    embed_size, hidden_size, vocab_size, num_layers = 16, 32, 32, 2
    B, T = 2, 8

    key = jax.random.PRNGKey(0)
    kp, kf, kc = jax.random.split(key, 3)
    params = init_params(kp, embed_size, hidden_size, vocab_size, num_layers)

    features = jax.random.normal(kf, (B, embed_size), jnp.float32)
    captions = jax.random.randint(kc, (T, B), 0, vocab_size, jnp.int32)

    out = jax.block_until_ready(decoder_forward(params, features, captions))
    assert out.shape == (T + 1, B, vocab_size), out.shape

    ref = decoder_forward_ref(params, features, captions)
    assert jnp.allclose(out, ref, atol=2e-3, rtol=2e-3), (
        float(jnp.max(jnp.abs(out - ref)))
    )
    print("KERNEL_OK")
</pallas_src>

<mosaic_0001>
module attributes {stable_mosaic.version = 11 : i64} {
  func.func @_linear_kernel(%arg0: i32, %arg1: i32, %arg2: memref<18x32xf32, #tpu.memory_space<vmem>>, %arg3: memref<32x32xf32, #tpu.memory_space<vmem>>, %arg4: memref<1x32xf32, #tpu.memory_space<vmem>>, %arg5: memref<18x32xf32, #tpu.memory_space<vmem>>) attributes {dimension_semantics = [#tpu.dimension_semantics<parallel>, #tpu.dimension_semantics<parallel>], iteration_bounds = array<i64: 1, 1>, scalar_prefetch = 0 : i64, scratch_operands = 0 : i64, tpu.core_type = #tpu.core_type<tc>, window_params = [{transform_indices = @transform_0, window_bounds = array<i64: 18, 32>}, {transform_indices = @transform_1, window_bounds = array<i64: 32, 32>}, {transform_indices = @transform_2, window_bounds = array<i64: 1, 32>}, {transform_indices = @transform_3, window_bounds = array<i64: 18, 32>}]} {
    %c0 = arith.constant 0 : index
    %c0_0 = arith.constant 0 : index
    %0 = vector.load %arg2[%c0, %c0_0] : memref<18x32xf32, #tpu.memory_space<vmem>>, vector<18x32xf32>
    %c0_1 = arith.constant 0 : index
    %c0_2 = arith.constant 0 : index
    %1 = vector.load %arg3[%c0_1, %c0_2] : memref<32x32xf32, #tpu.memory_space<vmem>>, vector<32x32xf32>
    %cst = arith.constant dense<0.000000e+00> : vector<18x32xf32>
    %2 = tpu.matmul %0, %1, %cst {dimension_numbers = #tpu.dot_dimension_numbers<[1], [0], [0], [1], [0, 0, 1, 1], [], []>} : vector<18x32xf32>, vector<32x32xf32>, vector<18x32xf32> -> vector<18x32xf32>
    %c0_3 = arith.constant 0 : index
    %c0_4 = arith.constant 0 : index
    %3 = vector.load %arg4[%c0_3, %c0_4] : memref<1x32xf32, #tpu.memory_space<vmem>>, vector<1x32xf32>
    %4 = vector.broadcast %3 : vector<1x32xf32> to vector<18x32xf32>
    %5 = arith.addf %2, %4 : vector<18x32xf32>
    %c0_5 = arith.constant 0 : index
    %c0_6 = arith.constant 0 : index
    %6 = vector.load %arg5[%c0_5, %c0_6] : memref<18x32xf32, #tpu.memory_space<vmem>>, vector<18x32xf32>
    tpu.vector_store %arg5[%c0_5, %c0_6], %5 {strides = array<i32>} : memref<18x32xf32, #tpu.memory_space<vmem>>, vector<18x32xf32>,
    return
  }
  func.func @transform_0(%arg0: i32, %arg1: i32) -> (i32, i32) {
    %c0_i32 = arith.constant 0 : i32
    %c0_i32_0 = arith.constant 0 : i32
    return %arg0, %c0_i32 : i32, i32
  }
  func.func @transform_1(%arg0: i32, %arg1: i32) -> (i32, i32) {
    %c0_i32 = arith.constant 0 : i32
    %c0_i32_0 = arith.constant 0 : i32
    return %c0_i32, %arg1 : i32, i32
  }
  func.func @transform_2(%arg0: i32, %arg1: i32) -> (i32, i32) {
    %c0_i32 = arith.constant 0 : i32
    %c0_i32_0 = arith.constant 0 : i32
    return %c0_i32, %arg1 : i32, i32
  }
  func.func @transform_3(%arg0: i32, %arg1: i32) -> (i32, i32) {
    %c0_i32 = arith.constant 0 : i32
    return %arg0, %arg1 : i32, i32
  }
}

module attributes {stable_mosaic.version = 11 : i64} {
  func.func @kernel(%arg0: i32, %arg1: memref<9x2x16xf32, #tpu.memory_space<vmem>>, %arg2: memref<48x128xf32, #tpu.memory_space<vmem>>, %arg3: memref<1x128xf32, #tpu.memory_space<vmem>>, %arg4: memref<64x128xf32, #tpu.memory_space<vmem>>, %arg5: memref<1x128xf32, #tpu.memory_space<vmem>>, %arg6: memref<9x2x32xf32, #tpu.memory_space<vmem>>, %arg7: memref<9x2x32xf32, #tpu.memory_space<vmem>>, %arg8: memref<9x2x32xf32, #tpu.memory_space<vmem>>) attributes {dimension_semantics = [#tpu.dimension_semantics<arbitrary>], iteration_bounds = array<i64: 1>, scalar_prefetch = 0 : i64, scratch_operands = 2 : i64, tpu.core_type = #tpu.core_type<tc>, window_params = [{pipeline_mode = #tpu.pipeline_mode<synchronous>, transform_indices = @transform_0, window_bounds = array<i64: 9, 2, 16>}, {pipeline_mode = #tpu.pipeline_mode<synchronous>, transform_indices = @transform_1, window_bounds = array<i64: 48, 128>}, {pipeline_mode = #tpu.pipeline_mode<synchronous>, transform_indices = @transform_2, window_bounds = array<i64: 1, 128>}, {pipeline_mode = #tpu.pipeline_mode<synchronous>, transform_indices = @transform_3, window_bounds = array<i64: 64, 128>}, {pipeline_mode = #tpu.pipeline_mode<synchronous>, transform_indices = @transform_4, window_bounds = array<i64: 1, 128>}, {pipeline_mode = #tpu.pipeline_mode<synchronous>, transform_indices = @transform_5, window_bounds = array<i64: 9, 2, 32>}]} {
    %c0 = arith.constant 0 : index
    %c0_0 = arith.constant 0 : index
    %0 = vector.load %arg2[%c0, %c0_0] : memref<48x128xf32, #tpu.memory_space<vmem>>, vector<48x128xf32>
    %c0_1 = arith.constant 0 : index
    %c0_2 = arith.constant 0 : index
    %1 = vector.load %arg3[%c0_1, %c0_2] : memref<1x128xf32, #tpu.memory_space<vmem>>, vector<1x128xf32>
    %cst = arith.constant 0.000000e+00 : f32
    %2 = vector.broadcast %cst : f32 to vector<2x32xf32>
    %c0_i32 = arith.constant 0 : i32
    %c9_i32 = arith.constant 9 : i32
    %3 = arith.addi %c0_i32, %c9_i32 : i32
    %c1_i32 = arith.constant 1 : i32
    %4:2 = scf.for %arg9 = %c0_i32 to %3 step %c1_i32 iter_args(%arg10 = %2, %arg11 = %2) -> (vector<2x32xf32>, vector<2x32xf32>)  : i32 {
      %10 = arith.index_cast %arg9 : i32 to index
      %c0_13 = arith.constant 0 : index
      %c0_14 = arith.constant 0 : index
      %11 = vector.load %arg1[%10, %c0_13, %c0_14] : memref<9x2x16xf32, #tpu.memory_space<vmem>>, vector<1x2x16xf32>
      %12 = vector.shape_cast %11 : vector<1x2x16xf32> to vector<2x16xf32>
      %13 = tpu.concatenate %12, %arg10 in 1 : vector<2x16xf32>, vector<2x32xf32> -> vector<2x48xf32>
      %cst_15 = arith.constant dense<0.000000e+00> : vector<2x128xf32>
      %14 = tpu.matmul %13, %0, %cst_15 {dimension_numbers = #tpu.dot_dimension_numbers<[1], [0], [0], [1], [0, 0, 1, 1], [], []>} : vector<2x48xf32>, vector<48x128xf32>, vector<2x128xf32> -> vector<2x128xf32>
      %15 = vector.broadcast %1 : vector<1x128xf32> to vector<2x128xf32>
      %16 = arith.addf %14, %15 : vector<2x128xf32>
      %17 = vector.extract_strided_slice %16 {offsets = [0, 0], sizes = [2, 32], strides = [1, 1]} : vector<2x128xf32> to vector<2x32xf32>
      %18 = arith.negf %17 : vector<2x32xf32>
      %19 = math.exp %18 : vector<2x32xf32>
      %cst_16 = arith.constant 1.000000e+00 : f32
      %20 = vector.broadcast %cst_16 : f32 to vector<2x32xf32>
      %21 = arith.addf %20, %19 : vector<2x32xf32>
      %22 = arith.divf %20, %21 : vector<2x32xf32>
      %23 = vector.extract_strided_slice %16 {offsets = [0, 32], sizes = [2, 32], strides = [1, 1]} : vector<2x128xf32> to vector<2x32xf32>
      %24 = arith.negf %23 : vector<2x32xf32>
      %25 = math.exp %24 : vector<2x32xf32>
      %cst_17 = arith.constant 1.000000e+00 : f32
      %26 = vector.broadcast %cst_17 : f32 to vector<2x32xf32>
      %27 = arith.addf %26, %25 : vector<2x32xf32>
      %28 = arith.divf %26, %27 : vector<2x32xf32>
      %29 = vector.extract_strided_slice %16 {offsets = [0, 64], sizes = [2, 32], strides = [1, 1]} : vector<2x128xf32> to vector<2x32xf32>
      %30 = math.tanh %29 : vector<2x32xf32>
      %31 = vector.extract_strided_slice %16 {offsets = [0, 96], sizes = [2, 32], strides = [1, 1]} : vector<2x128xf32> to vector<2x32xf32>
      %32 = arith.negf %31 : vector<2x32xf32>
      %33 = math.exp %32 : vector<2x32xf32>
      %cst_18 = arith.constant 1.000000e+00 : f32
      %34 = vector.broadcast %cst_18 : f32 to vector<2x32xf32>
      %35 = arith.addf %34, %33 : vector<2x32xf32>
      %36 = arith.divf %34, %35 : vector<2x32xf32>
      %37 = arith.mulf %28, %arg11 : vector<2x32xf32>
      %38 = arith.mulf %22, %30 : vector<2x32xf32>
      %39 = arith.addf %37, %38 : vector<2x32xf32>
      %40 = math.tanh %39 : vector<2x32xf32>
      %41 = arith.mulf %36, %40 : vector<2x32xf32>
      %42 = arith.index_cast %arg9 : i32 to index
      %c0_19 = arith.constant 0 : index
      %c0_20 = arith.constant 0 : index
      %43 = vector.load %arg7[%42, %c0_19, %c0_20] : memref<9x2x32xf32, #tpu.memory_space<vmem>>, vector<1x2x32xf32>
      %44 = vector.shape_cast %43 : vector<1x2x32xf32> to vector<2x32xf32>
      %45 = vector.shape_cast %41 : vector<2x32xf32> to vector<1x2x32xf32>
      tpu.vector_store %arg7[%42, %c0_19, %c0_20], %45 {strides = array<i32>} : memref<9x2x32xf32, #tpu.memory_space<vmem>>, vector<1x2x32xf32>,
      scf.yield %41, %39 : vector<2x32xf32>, vector<2x32xf32>
    }
    %c9_i32_3 = arith.constant 9 : i32
    %c0_4 = arith.constant 0 : index
    %c0_5 = arith.constant 0 : index
    %5 = vector.load %arg4[%c0_4, %c0_5] : memref<64x128xf32, #tpu.memory_space<vmem>>, vector<64x128xf32>
    %c0_6 = arith.constant 0 : index
    %c0_7 = arith.constant 0 : index
    %6 = vector.load %arg5[%c0_6, %c0_7] : memref<1x128xf32, #tpu.memory_space<vmem>>, vector<1x128xf32>
    %cst_8 = arith.constant 0.000000e+00 : f32
    %7 = vector.broadcast %cst_8 : f32 to vector<2x32xf32>
    %c0_i32_9 = arith.constant 0 : i32
    %c9_i32_10 = arith.constant 9 : i32
    %8 = arith.addi %c0_i32_9, %c9_i32_10 : i32
    %c1_i32_11 = arith.constant 1 : i32
    %9:2 = scf.for %arg9 = %c0_i32_9 to %8 step %c1_i32_11 iter_args(%arg10 = %7, %arg11 = %7) -> (vector<2x32xf32>, vector<2x32xf32>)  : i32 {
      %10 = arith.index_cast %arg9 : i32 to index
      %c0_13 = arith.constant 0 : index
      %c0_14 = arith.constant 0 : index
      %11 = vector.load %arg7[%10, %c0_13, %c0_14] : memref<9x2x32xf32, #tpu.memory_space<vmem>>, vector<1x2x32xf32>
      %12 = vector.shape_cast %11 : vector<1x2x32xf32> to vector<2x32xf32>
      %13 = tpu.concatenate %12, %arg10 in 1 : vector<2x32xf32>, vector<2x32xf32> -> vector<2x64xf32>
      %cst_15 = arith.constant dense<0.000000e+00> : vector<2x128xf32>
      %14 = tpu.matmul %13, %5, %cst_15 {dimension_numbers = #tpu.dot_dimension_numbers<[1], [0], [0], [1], [0, 0, 1, 1], [], []>} : vector<2x64xf32>, vector<64x128xf32>, vector<2x128xf32> -> vector<2x128xf32>
      %15 = vector.broadcast %6 : vector<1x128xf32> to vector<2x128xf32>
      %16 = arith.addf %14, %15 : vector<2x128xf32>
      %17 = vector.extract_strided_slice %16 {offsets = [0, 0], sizes = [2, 32], strides = [1, 1]} : vector<2x128xf32> to vector<2x32xf32>
      %18 = arith.negf %17 : vector<2x32xf32>
      %19 = math.exp %18 : vector<2x32xf32>
      %cst_16 = arith.constant 1.000000e+00 : f32
      %20 = vector.broadcast %cst_16 : f32 to vector<2x32xf32>
      %21 = arith.addf %20, %19 : vector<2x32xf32>
      %22 = arith.divf %20, %21 : vector<2x32xf32>
      %23 = vector.extract_strided_slice %16 {offsets = [0, 32], sizes = [2, 32], strides = [1, 1]} : vector<2x128xf32> to vector<2x32xf32>
      %24 = arith.negf %23 : vector<2x32xf32>
      %25 = math.exp %24 : vector<2x32xf32>
      %cst_17 = arith.constant 1.000000e+00 : f32
      %26 = vector.broadcast %cst_17 : f32 to vector<2x32xf32>
      %27 = arith.addf %26, %25 : vector<2x32xf32>
      %28 = arith.divf %26, %27 : vector<2x32xf32>
      %29 = vector.extract_strided_slice %16 {offsets = [0, 64], sizes = [2, 32], strides = [1, 1]} : vector<2x128xf32> to vector<2x32xf32>
      %30 = math.tanh %29 : vector<2x32xf32>
      %31 = vector.extract_strided_slice %16 {offsets = [0, 96], sizes = [2, 32], strides = [1, 1]} : vector<2x128xf32> to vector<2x32xf32>
      %32 = arith.negf %31 : vector<2x32xf32>
      %33 = math.exp %32 : vector<2x32xf32>
      %cst_18 = arith.constant 1.000000e+00 : f32
      %34 = vector.broadcast %cst_18 : f32 to vector<2x32xf32>
      %35 = arith.addf %34, %33 : vector<2x32xf32>
      %36 = arith.divf %34, %35 : vector<2x32xf32>
      %37 = arith.mulf %28, %arg11 : vector<2x32xf32>
      %38 = arith.mulf %22, %30 : vector<2x32xf32>
      %39 = arith.addf %37, %38 : vector<2x32xf32>
      %40 = math.tanh %39 : vector<2x32xf32>
      %41 = arith.mulf %36, %40 : vector<2x32xf32>
      %42 = arith.index_cast %arg9 : i32 to index
      %c0_19 = arith.constant 0 : index
      %c0_20 = arith.constant 0 : index
      %43 = vector.load %arg6[%42, %c0_19, %c0_20] : memref<9x2x32xf32, #tpu.memory_space<vmem>>, vector<1x2x32xf32>
      %44 = vector.shape_cast %43 : vector<1x2x32xf32> to vector<2x32xf32>
      %45 = vector.shape_cast %41 : vector<2x32xf32> to vector<1x2x32xf32>
      tpu.vector_store %arg6[%42, %c0_19, %c0_20], %45 {strides = array<i32>} : memref<9x2x32xf32, #tpu.memory_space<vmem>>, vector<1x2x32xf32>,
      scf.yield %41, %39 : vector<2x32xf32>, vector<2x32xf32>
    }
    %c9_i32_12 = arith.constant 9 : i32
    return
  }
  func.func @transform_0(%arg0: i32) -> (i32, i32, i32) {
    %c0_i32 = arith.constant 0 : i32
    %c0_i32_0 = arith.constant 0 : i32
    %c0_i32_1 = arith.constant 0 : i32
    %c0_i32_2 = arith.constant 0 : i32
    return %c0_i32, %c0_i32_0, %c0_i32_1 : i32, i32, i32
  }
  func.func @transform_1(%arg0: i32) -> (i32, i32) {
    %c0_i32 = arith.constant 0 : i32
    %c0_i32_0 = arith.constant 0 : i32
    %c0_i32_1 = arith.constant 0 : i32
    return %c0_i32, %c0_i32_0 : i32, i32
  }
  func.func @transform_2(%arg0: i32) -> (i32, i32) {
    %c0_i32 = arith.constant 0 : i32
    %c0_i32_0 = arith.constant 0 : i32
    %c0_i32_1 = arith.constant 0 : i32
    return %c0_i32, %c0_i32_0 : i32, i32
  }
  func.func @transform_3(%arg0: i32) -> (i32, i32) {
    %c0_i32 = arith.constant 0 : i32
    %c0_i32_0 = arith.constant 0 : i32
    %c0_i32_1 = arith.constant 0 : i32
    return %c0_i32, %c0_i32_0 : i32, i32
  }
  func.func @transform_4(%arg0: i32) -> (i32, i32) {
    %c0_i32 = arith.constant 0 : i32
    %c0_i32_0 = arith.constant 0 : i32
    %c0_i32_1 = arith.constant 0 : i32
    return %c0_i32, %c0_i32_0 : i32, i32
  }
  func.func @transform_5(%arg0: i32) -> (i32, i32, i32) {
    %c0_i32 = arith.constant 0 : i32
    %c0_i32_0 = arith.constant 0 : i32
    %c0_i32_1 = arith.constant 0 : i32
    %c0_i32_2 = arith.constant 0 : i32
    return %c0_i32, %c0_i32_0, %c0_i32_1 : i32, i32, i32
  }
}

</mosaic_0001>

<llo_original>
// kernel: decoder_forward.3
$region0: #{decoder_forward.3}
  #allocation0 [shape = 'u32[]', space=smem, size = 0x4, offset = 0x4, fixed_abs, tag = 'smem constant byte address 0x4 - core index']
  #allocation1 [shape = 'u32[144,128]{1,0:T(1,128)}', space=vmem, size = 0x12000, scoped, tag = 'internal scratch']
  %s0 = inlined_call_operand.vmem [shape: f32[18,32], index: 0, kind: input, shape index: {}]
  %s1 = inlined_call_operand.vmem [shape: f32[32,32], index: 1, kind: input, shape index: {}]
  %s2 = inlined_call_operand.vmem [shape: f32[1,32], index: 2, kind: input, shape index: {}]
  %s3 = inlined_call_operand.vmem [shape: f32[18,32], index: 3, kind: output, shape index: {}]
  %s4 = sld [smem:[#allocation0]]
  $region22: #{decoder_forward.3} parent=0
    _
  %s6 = ssub.s32 1, %s4
  %s7 = scalar_select 0, %s6, %s4
  // Predicated region
  $region2: #{decoder_forward.3} parent=0 // pred_check
    _
  $region3: #{decoder_forward.3} parent=0 // pred_check_branch
    %9 = sbr.rel (0) target = $region5
  $region4: #{decoder_forward.3} parent=0 // pred_region
    _
  $region5: #{decoder_forward.3} parent=0 // pred_fallthru
    _
  // Predicated region
  $region6: #{decoder_forward.3} parent=0 // pred_check
    _
  $region7: #{decoder_forward.3} parent=0 // pred_check_branch
    %11 = sbr.rel (0) target = $region9
  $region8: #{decoder_forward.3} parent=0 // pred_region
    _
  $region9: #{decoder_forward.3} parent=0 // pred_fallthru
    _
  // Predicated region
  $region10: #{decoder_forward.3} parent=0 // pred_check
    _
  $region11: #{decoder_forward.3} parent=0 // pred_check_branch
    %13 = sbr.rel (0) target = $region13
  $region12: #{decoder_forward.3} parent=0 // pred_region
    _
  $region13: #{decoder_forward.3} parent=0 // pred_fallthru
    _
  %v14 = vld [vmem:[%s0] sm:$0xff]
  %v15 = vld [vmem:[%s0 + $0x8] sm:$0xff]
  %v16 = vld [vmem:[%s0 + $0x10] sm:$0x3]
  %v17 = vld [vmem:[%s1] sm:$0xff]
  %v18 = vld [vmem:[%s1 + $0x8] sm:$0xff]
  %v19 = vld [vmem:[%s1 + $0x10] sm:$0xff]
  %v20 = vld [vmem:[%s1 + $0x18] sm:$0xff]
  %v21 = vld [vmem:[%s2] sm:$0x1]
  %v23 = vlaneseq
  %v24 = vshrl.u32 %v23, 7
  %v25 = vsub.s32 0, %v24
  %v26 = vrot.slane %v21, %v25
  %vm28 = vcmask 261120
  %v30 = vsel %vm28, %v14, 0
  %v33 = vsel %vm28, %v15, 0
  %v36 = vsel %vm28, %v16, 0
  %38 = vmatprep.subr.mxu0 0.0
  %39 = vmatpush1.msra.mxu0 0.0
  %40 = vmatprep.subr.mxu0 0.0
  %41 = vmatpush1.msra.mxu0 0.0
  %42 = vmatprep.subr.mxu0 0.0
  %43 = vmatpush1.msra.mxu0 0.0
  %44 = vmatprep.subr.mxu0 0.0
  %45 = vmatpush1.msra.mxu0 0.0
  %46 = vmatprep.subr.mxu0 0.0
  %47 = vmatpush1.msra.mxu0 0.0
  %48 = vmatprep.subr.mxu0 0.0
  %49 = vmatpush1.msra.mxu0 0.0
  %50 = vmatprep.subr.mxu0 0.0
  %51 = vmatpush1.msra.mxu0 0.0
  %52 = vmatprep.subr.mxu0 0.0
  %53 = vmatpush1.msra.mxu0 0.0
  %54 = vmatprep.subr.mxu0 0.0
  %55 = vmatpush1.msra.mxu0 0.0
  %56 = vmatprep.subr.mxu0 0.0
  %57 = vmatpush1.msra.mxu0 0.0
  %58 = vmatprep.subr.mxu0 0.0
  %59 = vmatpush1.msra.mxu0 0.0
  %60 = vmatprep.subr.mxu0 0.0
  %61 = vmatpush1.msra.mxu0 0.0
  %62 = vmatprep.subr.mxu0 0.0
  %63 = vmatpush1.msra.mxu0 %v20
  %64 = vmatprep.subr.mxu0 0.0
  %65 = vmatpush1.msra.mxu0 %v19
  %66 = vmatprep.subr.mxu0 0.0
  %67 = vmatpush1.msra.mxu0 %v18
  %68 = vmatprep.subr.mxu0 0.0
  %69 = vmatpush1.msra.mxu0 %v17
  %70 = vmatprep.subr.mxu0 0.0
  %71 = vmatpush2.msra.mxu0 0.0
  %72 = vmatprep.subr.mxu0 0.0
  %73 = vmatpush2.msra.mxu0 0.0
  %74 = vmatprep.subr.mxu0 0.0
  %75 = vmatpush2.msra.mxu0 0.0
  %76 = vmatprep.subr.mxu0 0.0
  %77 = vmatpush2.msra.mxu0 0.0
  %78 = vmatprep.subr.mxu0 0.0
  %79 = vmatpush2.msra.mxu0 0.0
  %80 = vmatprep.subr.mxu0 0.0
  %81 = vmatpush2.msra.mxu0 0.0
  %82 = vmatprep.subr.mxu0 0.0
  %83 = vmatpush2.msra.mxu0 0.0
  %84 = vmatprep.subr.mxu0 0.0
  %85 = vmatpush2.msra.mxu0 0.0
  %86 = vmatprep.subr.mxu0 0.0
  %87 = vmatpush2.msra.mxu0 0.0
  %88 = vmatprep.subr.mxu0 0.0
  %89 = vmatpush2.msra.mxu0 0.0
  %90 = vmatprep.subr.mxu0 0.0
  %91 = vmatpush2.msra.mxu0 0.0
  %92 = vmatprep.subr.mxu0 0.0
  %93 = vmatpush2.msra.mxu0 0.0
  %94 = vmatprep.subr.mxu0 0.0
  %95 = vmatpush2.msra.mxu0 0.0
  %96 = vmatprep.subr.mxu0 0.0
  %97 = vmatpush2.msra.mxu0 0.0
  %98 = vmatprep.subr.mxu0 0.0
  %99 = vmatpush2.msra.mxu0 0.0
  %100 = vmatprep.subr.mxu0 0.0
  %101 = vmatpush2.msra.mxu0 0.0
  %102 = vmatprep.mubr.f32.mxu0 0.0
  %103 = vmatmul.mubr.f32.gmra.mxu0 %v30
  %v104 = vpop.f32.mrf.mxu0
  %v105 = vadd.f32 %v26, %v104
  %v106 = vpop.f32.mrf.mxu0
  %107 = vmatprep.mubr.f32.mxu0 0.0
  %108 = vmatmul.mubr.f32.gmra.mxu0 %v33
  %v109 = vpop.f32.mrf.mxu0
  %v110 = vadd.f32 %v26, %v109
  %v111 = vpop.f32.mrf.mxu0
  %112 = vmatprep.mubr.f32.mxu0 0.0
  %113 = vmatmul.mubr.f32.gmra.mxu0 %v36
  %v114 = vpop.f32.mrf.mxu0
  %v115 = vadd.f32 %v26, %v114
  %v116 = vpop.f32.mrf.mxu0
  %117 = vdwg.mxu0
  %118 = vst.msk [vmem:[%s3] sm:$0xff] %vm28, %v105
  %119 = vst.msk [vmem:[%s3 + $0x8] sm:$0xff] %vm28, %v110
  %vm120 = vcmask 254976
  %121 = vst.msk [vmem:[%s3 + $0x10] sm:$0x3] %vm120, %v115
  // Predicated region
  $region14: #{decoder_forward.3} parent=0 // pred_check
    _
  $region15: #{decoder_forward.3} parent=0 // pred_check_branch
    %123 = sbr.rel (0) target = $region17
  $region16: #{decoder_forward.3} parent=0 // pred_region
    _
  $region17: #{decoder_forward.3} parent=0 // pred_fallthru
    _
  // Predicated region
  $region18: #{decoder_forward.3} parent=0 // pred_check
    _
  $region19: #{decoder_forward.3} parent=0 // pred_check_branch
    %125 = sbr.rel (0) target = $region21
  $region20: #{decoder_forward.3} parent=0 // pred_region
    _
  $region21: #{decoder_forward.3} parent=0 // pred_fallthru
    _

// kernel: decoder_forward.2
$region0: #{decoder_forward.2}
  #allocation0 [shape = 'u32[]', space=smem, size = 0x4, offset = 0x4, fixed_abs, tag = 'smem constant byte address 0x4 - core index']
  #allocation1 [shape = 'u32[144,128]{1,0:T(1,128)}', space=vmem, size = 0x12000, scoped, tag = 'internal scratch']
  #allocation2 [shape = 'f32[9,2,32]{2,1,0:T(2,128)}', space=vmem, size = 0x2400, scoped, tag = 'scratch operand']
  #allocation3 [shape = 'f32[9,2,32]{2,1,0:T(2,128)}', space=vmem, size = 0x2400, scoped, tag = 'scratch operand']
  %s0 = inlined_call_operand.vmem [shape: f32[9,2,16], index: 0, kind: input, shape index: {}]
  %s1 = inlined_call_operand.vmem [shape: f32[48,128], index: 1, kind: input, shape index: {}]
  %s2 = inlined_call_operand.vmem [shape: f32[1,128], index: 2, kind: input, shape index: {}]
  %s3 = inlined_call_operand.vmem [shape: f32[64,128], index: 3, kind: input, shape index: {}]
  %s4 = inlined_call_operand.vmem [shape: f32[1,128], index: 4, kind: input, shape index: {}]
  %s5 = inlined_call_operand.vmem [shape: f32[9,2,32], index: 5, kind: output, shape index: {}]
  %s6 = sld [smem:[#allocation0]]
  $region44: #{decoder_forward.2} parent=0
    _
  %s8 = ssub.s32 1, %s6
  %s9 = scalar_select 0, %s8, %s6
  // Predicated region
  $region2: #{decoder_forward.2} parent=0 // pred_check
    _
  $region3: #{decoder_forward.2} parent=0 // pred_check_branch
    %11 = sbr.rel (0) target = $region5
  $region4: #{decoder_forward.2} parent=0 // pred_region
    _
  $region5: #{decoder_forward.2} parent=0 // pred_fallthru
    _
  // Predicated region
  $region6: #{decoder_forward.2} parent=0 // pred_check
    _
  $region7: #{decoder_forward.2} parent=0 // pred_check_branch
    %13 = sbr.rel (0) target = $region9
  $region8: #{decoder_forward.2} parent=0 // pred_region
    _
  $region9: #{decoder_forward.2} parent=0 // pred_fallthru
    _
  // Predicated region
  $region10: #{decoder_forward.2} parent=0 // pred_check
    _
  $region11: #{decoder_forward.2} parent=0 // pred_check_branch
    %15 = sbr.rel (0) target = $region13
  $region12: #{decoder_forward.2} parent=0 // pred_region
    _
  $region13: #{decoder_forward.2} parent=0 // pred_fallthru
    _
  // Predicated region
  $region14: #{decoder_forward.2} parent=0 // pred_check
    _
  $region15: #{decoder_forward.2} parent=0 // pred_check_branch
    %17 = sbr.rel (0) target = $region17
  $region16: #{decoder_forward.2} parent=0 // pred_region
    _
  $region17: #{decoder_forward.2} parent=0 // pred_fallthru
    _
  // Predicated region
  $region18: #{decoder_forward.2} parent=0 // pred_check
    _
  $region19: #{decoder_forward.2} parent=0 // pred_check_branch
    %19 = sbr.rel (0) target = $region21
  $region20: #{decoder_forward.2} parent=0 // pred_region
    _
  $region21: #{decoder_forward.2} parent=0 // pred_fallthru
    _
  %v20 = vld [vmem:[%s1] sm:$0xff]
  %v21 = vld [vmem:[%s1 + $0x8] sm:$0xff]
  %v22 = vld [vmem:[%s1 + $0x10] sm:$0xff]
  %v23 = vld [vmem:[%s1 + $0x18] sm:$0xff]
  %v24 = vld [vmem:[%s1 + $0x20] sm:$0xff]
  %v25 = vld [vmem:[%s1 + $0x28] sm:$0xff]
  %v26 = vld [vmem:[%s2] sm:$0x1]
  loop: start=0, step=1, limit=9
  $region22: #{decoder_forward.2} parent=0 // loop_pre_header
    _
  $region23: #{decoder_forward.2} parent=0 // loop_header
    %s28 = sphi 0, %s32
    %p29 = scmp.ge.s32.totalorder %s28, 9
    %v33 = vphi 0.0, %v147
    %v34 = vphi 0.0, %v141
  $region24: #{decoder_forward.2} parent=0 // loop_header_branch
    %31 = sbr.rel (%p29) target = $region28
  $region25: #{decoder_forward.2} parent=0 // loop_body
    %s35 = smul.u32 %s28, 2
    %s36 = scalar_lea.vmem %s0, %s35
    %v37 = vld [vmem:[%s36] sm:$0x3]
    %39 = vrot.lane.b32.xlu0 %v33, 48
    %v40 = vpop.permute.xlu0 %39
    %vm42 = vcmask 130048
    %v43 = vsel %vm42, %v37, %v40
    %v45 = vlaneseq
    %v46 = vshrl.u32 %v45, 7
    %v47 = vsub.s32 0, %v46
    %v48 = vrot.slane %v26, %v47
    %vm50 = vcmask 392192
    %v52 = vsel %vm50, %v43, 0
    %54 = vmatprep.subr.mxu0 0.0
    %55 = vmatpush1.msra.mxu0 0.0
    %56 = vmatprep.subr.mxu0 0.0
    %57 = vmatpush1.msra.mxu0 0.0
    %58 = vmatprep.subr.mxu0 0.0
    %59 = vmatpush1.msra.mxu0 0.0
    %60 = vmatprep.subr.mxu0 0.0
    %61 = vmatpush1.msra.mxu0 0.0
    %62 = vmatprep.subr.mxu0 0.0
    %63 = vmatpush1.msra.mxu0 0.0
    %64 = vmatprep.subr.mxu0 0.0
    %65 = vmatpush1.msra.mxu0 0.0
    %66 = vmatprep.subr.mxu0 0.0
    %67 = vmatpush1.msra.mxu0 0.0
    %68 = vmatprep.subr.mxu0 0.0
    %69 = vmatpush1.msra.mxu0 0.0
    %70 = vmatprep.subr.mxu0 0.0
    %71 = vmatpush1.msra.mxu0 0.0
    %72 = vmatprep.subr.mxu0 0.0
    %73 = vmatpush1.msra.mxu0 0.0
    %74 = vmatprep.subr.mxu0 0.0
    %75 = vmatpush1.msra.mxu0 %v25
    %76 = vmatprep.subr.mxu0 0.0
    %77 = vmatpush1.msra.mxu0 %v24
    %78 = vmatprep.subr.mxu0 0.0
    %79 = vmatpush1.msra.mxu0 %v23
    %80 = vmatprep.subr.mxu0 0.0
    %81 = vmatpush1.msra.mxu0 %v22
    %82 = vmatprep.subr.mxu0 0.0
    %83 = vmatpush1.msra.mxu0 %v21
    %84 = vmatprep.subr.mxu0 0.0
    %85 = vmatpush1.msra.mxu0 %v20
    %86 = vmatprep.subr.mxu0 0.0
    %87 = vmatpush2.msra.mxu0 0.0
    %88 = vmatprep.subr.mxu0 0.0
    %89 = vmatpush2.msra.mxu0 0.0
    %90 = vmatprep.subr.mxu0 0.0
    %91 = vmatpush2.msra.mxu0 0.0
    %92 = vmatprep.subr.mxu0 0.0
    %93 = vmatpush2.msra.mxu0 0.0
    %94 = vmatprep.subr.mxu0 0.0
    %95 = vmatpush2.msra.mxu0 0.0
    %96 = vmatprep.subr.mxu0 0.0
    %97 = vmatpush2.msra.mxu0 0.0
    %98 = vmatprep.subr.mxu0 0.0
    %99 = vmatpush2.msra.mxu0 0.0
    %100 = vmatprep.subr.mxu0 0.0
    %101 = vmatpush2.msra.mxu0 0.0
    %102 = vmatprep.subr.mxu0 0.0
    %103 = vmatpush2.msra.mxu0 0.0
    %104 = vmatprep.subr.mxu0 0.0
    %105 = vmatpush2.msra.mxu0 0.0
    %106 = vmatprep.subr.mxu0 0.0
    %107 = vmatpush2.msra.mxu0 0.0
    %108 = vmatprep.subr.mxu0 0.0
    %109 = vmatpush2.msra.mxu0 0.0
    %110 = vmatprep.subr.mxu0 0.0
    %111 = vmatpush2.msra.mxu0 0.0
    %112 = vmatprep.subr.mxu0 0.0
    %113 = vmatpush2.msra.mxu0 0.0
    %114 = vmatprep.subr.mxu0 0.0
    %115 = vmatpush2.msra.mxu0 0.0
    %116 = vmatprep.subr.mxu0 0.0
    %117 = vmatpush2.msra.mxu0 0.0
    %118 = vmatprep.mubr.f32.mxu0 0.0
    %119 = vmatmul.mubr.f32.gmra.mxu0 %v52
    %v120 = vpop.f32.mrf.mxu0
    %v121 = vadd.f32 %v48, %v120
    %v122 = vpop.f32.mrf.mxu0
    %123 = vdwg.mxu0
    %v124 = vxor.u32 %v121, 2147483648
    %v125 = vmul.f32 %v124, 1.442695
    %v126 = vpow.pop %v125
    %v127 = vadd.f32 %v126, 1.0
    %v128 = vrcp.pop %v127
    %v129 = vmul.f32 1.0, %v128
    %v130 = vtanh.pop %v121
    %v131 = vmul.f32 %v129, %v34
    %133 = vrot.lane.b32.xlu0 %v130, 64
    %v134 = vpop.permute.xlu0 %133
    %v136 = vmul.f32 %v129, %v134
    %138 = vrot.lane.b32.xlu0 %v136, 32
    %v139 = vpop.permute.xlu0 %138
    %v141 = vadd.f32 %v131, %v139
    %v142 = vtanh.pop %v141
    %144 = vrot.lane.b32.xlu0 %v142, 64
    %v145 = vpop.permute.xlu0 %144
    %v147 = vmul.f32 %v129, %v145
    %149 = vrot.lane.b32.xlu0 %v147, 32
    %v150 = vpop.permute.xlu0 %149
    %s152 = scalar_lea.vmem [#allocation2], %s35
    %vm153 = vcmask 254976
    %154 = vst.msk [vmem:[%s152] sm:$0x3] %vm153, %v150
  $region26: #{decoder_forward.2} parent=0 // loop_footer
    %s32 = sadd.s32 1, %s28
  $region27: #{decoder_forward.2} parent=0 // loop_footer_branch
    %27 = sbr.rel target = $region23
  $region28: #{decoder_forward.2} parent=0 // loop_exit
    _
  %v155 = vld [vmem:[%s3] sm:$0xff]
  %v156 = vld [vmem:[%s3 + $0x8] sm:$0xff]
  %v157 = vld [vmem:[%s3 + $0x10] sm:$0xff]
  %v158 = vld [vmem:[%s3 + $0x18] sm:$0xff]
  %v159 = vld [vmem:[%s3 + $0x20] sm:$0xff]
  %v160 = vld [vmem:[%s3 + $0x28] sm:$0xff]
  %v161 = vld [vmem:[%s3 + $0x30] sm:$0xff]
  %v162 = vld [vmem:[%s3 + $0x38] sm:$0xff]
  %v163 = vld [vmem:[%s4] sm:$0x1]
  loop: start=0, step=1, limit=9
  $region29: #{decoder_forward.2} parent=0 // loop_pre_header
    _
  $region30: #{decoder_forward.2} parent=0 // loop_header
    %s165 = sphi 0, %s169
    %p166 = scmp.ge.s32.totalorder %s165, 9
    %v170 = vphi 0.0, %v284
    %v171 = vphi 0.0, %v278
  $region31: #{decoder_forward.2} parent=0 // loop_header_branch
    %168 = sbr.rel (%p166) target = $region35
  $region32: #{decoder_forward.2} parent=0 // loop_body
    %s172 = smul.u32 %s165, 2
    %s173 = scalar_lea.vmem [#allocation2], %s172
    %v174 = vld [vmem:[%s173] sm:$0x3]
    %176 = vrot.lane.b32.xlu0 %v170, 64
    %v177 = vpop.permute.xlu0 %176
    %vm179 = vcmask 261120
    %v180 = vsel %vm179, %v174, %v177
    %v182 = vlaneseq
    %v183 = vshrl.u32 %v182, 7
    %v184 = vsub.s32 0, %v183
    %v185 = vrot.slane %v163, %v184
    %vm187 = vcmask 523264
    %v189 = vsel %vm187, %v180, 0
    %191 = vmatprep.subr.mxu0 0.0
    %192 = vmatpush1.msra.mxu0 0.0
    %193 = vmatprep.subr.mxu0 0.0
    %194 = vmatpush1.msra.mxu0 0.0
    %195 = vmatprep.subr.mxu0 0.0
    %196 = vmatpush1.msra.mxu0 0.0
    %197 = vmatprep.subr.mxu0 0.0
    %198 = vmatpush1.msra.mxu0 0.0
    %199 = vmatprep.subr.mxu0 0.0
    %200 = vmatpush1.msra.mxu0 0.0
    %201 = vmatprep.subr.mxu0 0.0
    %202 = vmatpush1.msra.mxu0 0.0
    %203 = vmatprep.subr.mxu0 0.0
    %204 = vmatpush1.msra.mxu0 0.0
    %205 = vmatprep.subr.mxu0 0.0
    %206 = vmatpush1.msra.mxu0 0.0
    %207 = vmatprep.subr.mxu0 0.0
    %208 = vmatpush1.msra.mxu0 %v162
    %209 = vmatprep.subr.mxu0 0.0
    %210 = vmatpush1.msra.mxu0 %v161
    %211 = vmatprep.subr.mxu0 0.0
    %212 = vmatpush1.msra.mxu0 %v160
    %213 = vmatprep.subr.mxu0 0.0
    %214 = vmatpush1.msra.mxu0 %v159
    %215 = vmatprep.subr.mxu0 0.0
    %216 = vmatpush1.msra.mxu0 %v158
    %217 = vmatprep.subr.mxu0 0.0
    %218 = vmatpush1.msra.mxu0 %v157
    %219 = vmatprep.subr.mxu0 0.0
    %220 = vmatpush1.msra.mxu0 %v156
    %221 = vmatprep.subr.mxu0 0.0
    %222 = vmatpush1.msra.mxu0 %v155
    %223 = vmatprep.subr.mxu0 0.0
    %224 = vmatpush2.msra.mxu0 0.0
    %225 = vmatprep.subr.mxu0 0.0
    %226 = vmatpush2.msra.mxu0 0.0
    %227 = vmatprep.subr.mxu0 0.0
    %228 = vmatpush2.msra.mxu0 0.0
    %229 = vmatprep.subr.mxu0 0.0
    %230 = vmatpush2.msra.mxu0 0.0
    %231 = vmatprep.subr.mxu0 0.0
    %232 = vmatpush2.msra.mxu0 0.0
    %233 = vmatprep.subr.mxu0 0.0
    %234 = vmatpush2.msra.mxu0 0.0
    %235 = vmatprep.subr.mxu0 0.0
    %236 = vmatpush2.msra.mxu0 0.0
    %237 = vmatprep.subr.mxu0 0.0
    %238 = vmatpush2.msra.mxu0 0.0
    %239 = vmatprep.subr.mxu0 0.0
    %240 = vmatpush2.msra.mxu0 0.0
    %241 = vmatprep.subr.mxu0 0.0
    %242 = vmatpush2.msra.mxu0 0.0
    %243 = vmatprep.subr.mxu0 0.0
    %244 = vmatpush2.msra.mxu0 0.0
    %245 = vmatprep.subr.mxu0 0.0
    %246 = vmatpush2.msra.mxu0 0.0
    %247 = vmatprep.subr.mxu0 0.0
    %248 = vmatpush2.msra.mxu0 0.0
    %249 = vmatprep.subr.mxu0 0.0
    %250 = vmatpush2.msra.mxu0 0.0
    %251 = vmatprep.subr.mxu0 0.0
    %252 = vmatpush2.msra.mxu0 0.0
    %253 = vmatprep.subr.mxu0 0.0
    %254 = vmatpush2.msra.mxu0 0.0
    %255 = vmatprep.mubr.f32.mxu0 0.0
    %256 = vmatmul.mubr.f32.gmra.mxu0 %v189
    %v257 = vpop.f32.mrf.mxu0
    %v258 = vadd.f32 %v185, %v257
    %v259 = vpop.f32.mrf.mxu0
    %260 = vdwg.mxu0
    %v261 = vxor.u32 %v258, 2147483648
    %v262 = vmul.f32 %v261, 1.442695
    %v263 = vpow.pop %v262
    %v264 = vadd.f32 %v263, 1.0
    %v265 = vrcp.pop %v264
    %v266 = vmul.f32 1.0, %v265
    %v267 = vtanh.pop %v258
    %v268 = vmul.f32 %v266, %v171
    %270 = vrot.lane.b32.xlu0 %v267, 64
    %v271 = vpop.permute.xlu0 %270
    %v273 = vmul.f32 %v266, %v271
    %275 = vrot.lane.b32.xlu0 %v273, 32
    %v276 = vpop.permute.xlu0 %275
    %v278 = vadd.f32 %v268, %v276
    %v279 = vtanh.pop %v278
    %281 = vrot.lane.b32.xlu0 %v279, 64
    %v282 = vpop.permute.xlu0 %281
    %v284 = vmul.f32 %v266, %v282
    %286 = vrot.lane.b32.xlu0 %v284, 32
    %v287 = vpop.permute.xlu0 %286
    %s289 = scalar_lea.vmem %s5, %s172
    %vm290 = vcmask 254976
    %291 = vst.msk [vmem:[%s289] sm:$0x3] %vm290, %v287
  $region33: #{decoder_forward.2} parent=0 // loop_footer
    %s169 = sadd.s32 1, %s165
  $region34: #{decoder_forward.2} parent=0 // loop_footer_branch
    %164 = sbr.rel target = $region30
  $region35: #{decoder_forward.2} parent=0 // loop_exit
    _
  // Predicated region
  $region36: #{decoder_forward.2} parent=0 // pred_check
    _
  $region37: #{decoder_forward.2} parent=0 // pred_check_branch
    %293 = sbr.rel (0) target = $region39
  $region38: #{decoder_forward.2} parent=0 // pred_region
    _
  $region39: #{decoder_forward.2} parent=0 // pred_fallthru
    _
  // Predicated region
  $region40: #{decoder_forward.2} parent=0 // pred_check
    _
  $region41: #{decoder_forward.2} parent=0 // pred_check_branch
    %295 = sbr.rel (0) target = $region43
  $region42: #{decoder_forward.2} parent=0 // pred_region
    _
  $region43: #{decoder_forward.2} parent=0 // pred_fallthru
    _

</llo_original>
